<compile_context>
chip_gen: v6e
topology: v6e:2x2x1
jax: 0.10.0
libtpu: 0.0.40
codegen_flags: <defaults>
</compile_context>

<pallas_src>
import jax
import jax.numpy as jnp
from jax.experimental import pallas as pl
from jax.experimental.pallas import tpu as pltpu


def _round_up(x, m):
    return ((x + m - 1) // m) * m


def _make_center_subtract_kernel(S, D):
    """Kernel over lane-dense blocks: xv/out (tile, S*D), centers (tile, D)."""
    W = S * D

    def kernel(xv_ref, c_ref, out_ref):
        # Build the per-row center pattern [cx, cy, cz, cx, cy, cz, ...] of width W
        # using a lane-index mask + lane broadcasts (cheap VPU work, fully hidden
        # under DMA for this memory-bound kernel).
        lane = jax.lax.broadcasted_iota(jnp.int32, (1, W), 1) % D   # (1, W)
        c_full = c_ref[:, D - 1:D]                                  # (tile, 1)
        for d in range(D - 2, -1, -1):
            c_full = jnp.where(lane == d, c_ref[:, d:d + 1], c_full)  # -> (tile, W)
        out_ref[...] = xv_ref[...] - c_full

    return kernel


def _vmem_cap_bytes():
    """Generation-aware scoped-VMEM cap: ~75% of physical per-core VMEM."""
    try:
        phys = int(pltpu.get_tpu_info().vmem_capacity_bytes)
    except Exception:
        phys = 64 * 1024 * 1024  # conservative fallback (v7x per-TC size)
    return max(8 * 1024 * 1024, (phys * 3) // 4)


def tooth_centering_forward(X, *, row_tile=512):
    """JAX/Pallas equivalent of Tooth_Centering.forward.

    X is a dict with:
      X['X_v'] : (B, T, S, 3) float32  per-tooth sampled point clouds
      X['X']   : (B, T*S, 3)  float32  flattened point clouds
      X['C']   : (B, T, 3)    float32  per-tooth centroids
      X['6dof']: (B, T, 6)    float32  pass-through
    """
    xv = jnp.asarray(X['X_v'], dtype=jnp.float32)
    c = jnp.asarray(X['C'], dtype=jnp.float32)
    B, T, S, D = xv.shape
    N = B * T
    W = S * D

    # Free, row-major-contiguous lane-dense reshapes (no data movement).
    xv_flat = xv.reshape(N, W)
    c_flat = c.reshape(N, D)

    # Row tiling (no host-side padding — ragged last block is handled by Pallas):
    #  * N <= 16: one full-extent tile (legal because block == array extent).
    #  * N  > 16: tile is a multiple of 8 and small enough that the grid has at
    #    least 2 steps, so megacore ("parallel") sharding is effective on v7x.
    if N <= 16:
        tile = N
    else:
        tile = max(8, min(_round_up(row_tile, 8), _round_up(pl.cdiv(N, 2), 8)))
    n_tiles = pl.cdiv(N, tile)

    kernel = _make_center_subtract_kernel(S, D)

    # Budget: double-buffered xv + out blocks, tiny (lane-padded) center block,
    # plus compiler scratch headroom; capped generation-aware.
    block_bytes = tile * W * 4
    vmem_limit = int(min(_vmem_cap_bytes(), max(8 * 1024 * 1024, 6 * block_bytes)))

    cost = pl.CostEstimate(
        flops=N * W,                               # one subtract per element
        transcendentals=0,
        bytes_accessed=2 * N * W * 4 + N * D * 4,  # read xv + write out + read centers
    )

    out_flat = pl.pallas_call(
        kernel,
        out_shape=jax.ShapeDtypeStruct((N, W), jnp.float32),
        grid_spec=pltpu.PrefetchScalarGridSpec(
            num_scalar_prefetch=0,
            grid=(n_tiles,),
            in_specs=[
                pl.BlockSpec((tile, W), lambda i: (i, 0)),
                pl.BlockSpec((tile, D), lambda i: (i, 0)),
            ],
            out_specs=pl.BlockSpec((tile, W), lambda i: (i, 0)),
        ),
        compiler_params=pltpu.CompilerParams(
            dimension_semantics=("parallel",),
            vmem_limit_bytes=vmem_limit,
        ),
        cost_estimate=cost,
    )(xv_flat, c_flat)

    C = {}
    C['X_v'] = out_flat.reshape(B, T, S, D)
    C['X'] = out_flat.reshape(X['X'].shape)
    C['C'] = X['C']
    C['6dof'] = X['6dof']
    return C


def _build_inputs(key, B, T, S, D=3):
    k_xv, k_c, k_dof = jax.random.split(key, 3)
    X_v = jax.random.normal(k_xv, (B, T, S, D), dtype=jnp.float32)
    C_in = jax.random.normal(k_c, (B, T, D), dtype=jnp.float32)
    X_flat = X_v.reshape(B, T * S, D)
    dof = jax.random.normal(k_dof, (B, T, 6), dtype=jnp.float32)
    return {'X_v': X_v, 'X': X_flat, 'C': C_in, '6dof': dof}


def _check(out, X, B, T, S, D):
    ref_xv = X['X_v'] - X['C'][:, :, None, :]
    assert jnp.allclose(out['X_v'], ref_xv, atol=1e-6)
    assert jnp.allclose(out['X'], ref_xv.reshape(B, T * S, D), atol=1e-6)
    assert out['X_v'].shape == X['X_v'].shape
    assert out['X'].shape == X['X'].shape
    assert jnp.array_equal(out['C'], X['C'])
    assert jnp.array_equal(out['6dof'], X['6dof'])


if __name__ == "__main__":
    # TODO(synk): get_pcds_and_centers (vedo/trimesh surface sampling) is host-side
    # mesh preprocessing with no Pallas equivalent; only forward() is implemented.
    key = jax.random.PRNGKey(0)
    k1, k2, k3 = jax.random.split(key, 3)
    D = 3

    # Test 1: small shapes -> single full-extent tile path (N = 8).
    B, T, S = 2, 4, 8
    X = _build_inputs(k1, B, T, S, D)
    out = tooth_centering_forward(X)
    jax.block_until_ready(out['X_v'])
    _check(out, X, B, T, S, D)

    # Test 2: multi-tile + ragged final block, handled in-kernel (N = 26, tile = 8
    # -> 4 grid steps, last block only 2 valid rows; no host pad/slice).
    B2, T2, S2 = 2, 13, 8
    X2 = _build_inputs(k2, B2, T2, S2, D)
    out2 = tooth_centering_forward(X2, row_tile=8)
    jax.block_until_ready(out2['X_v'])
    _check(out2, X2, B2, T2, S2, D)

    # Test 3: medium N with default row_tile -> forced >= 2 grid steps
    # (N = 32 -> tile = 16, 2 evenly-divided blocks; megacore split path).
    B3, T3, S3 = 2, 16, 8
    X3 = _build_inputs(k3, B3, T3, S3, D)
    out3 = tooth_centering_forward(X3)
    jax.block_until_ready(out3['X_v'])
    _check(out3, X3, B3, T3, S3, D)

    print("KERNEL_OK")
</pallas_src>

<mosaic_0001>
module attributes {stable_mosaic.version = 11 : i64} {
  func.func @kernel(%arg0: i32, %arg1: memref<8x24xf32, #tpu.memory_space<vmem>>, %arg2: memref<8x3xf32, #tpu.memory_space<vmem>>, %arg3: memref<8x24xf32, #tpu.memory_space<vmem>>) attributes {dimension_semantics = [#tpu.dimension_semantics<parallel>], iteration_bounds = array<i64: 1>, scalar_prefetch = 0 : i64, scratch_operands = 0 : i64, tpu.core_type = #tpu.core_type<tc>, window_params = [{transform_indices = @transform_0, window_bounds = array<i64: 8, 24>}, {transform_indices = @transform_1, window_bounds = array<i64: 8, 3>}, {transform_indices = @transform_2, window_bounds = array<i64: 8, 24>}]} {
    %0 = tpu.iota {dimensions = array<i32: 1>} : vector<1x24xi32>
    %c3_i32 = arith.constant 3 : i32
    %c0_i32 = arith.constant 0 : i32
    %1 = arith.cmpi eq, %c3_i32, %c0_i32 : i32
    %c1_i32 = arith.constant 1 : i32
    %2 = arith.select %1, %c1_i32, %c3_i32 : i32
    %3 = vector.broadcast %2 : i32 to vector<1x24xi32>
    %4 = arith.remsi %0, %3 : vector<1x24xi32>
    %c0_i32_0 = arith.constant 0 : i32
    %5 = vector.broadcast %c0_i32_0 : i32 to vector<1x24xi32>
    %6 = arith.cmpi ne, %4, %5 : vector<1x24xi32>
    %c0_i32_1 = arith.constant 0 : i32
    %7 = vector.broadcast %c0_i32_1 : i32 to vector<1x24xi32>
    %8 = arith.cmpi slt, %4, %7 : vector<1x24xi32>
    %c0_i32_2 = arith.constant 0 : i32
    %9 = arith.cmpi slt, %2, %c0_i32_2 : i32
    %10 = vector.broadcast %9 : i1 to vector<1x24xi1>
    %11 = vector.broadcast %10 : vector<1x24xi1> to vector<1x24xi1>
    %12 = arith.xori %8, %11 : vector<1x24xi1>
    %13 = arith.andi %12, %6 : vector<1x24xi1>
    %14 = vector.broadcast %2 : i32 to vector<1x24xi32>
    %15 = arith.addi %4, %14 : vector<1x24xi32>
    %16 = arith.select %13, %15, %4 : vector<1x24xi1>, vector<1x24xi32>
    %c0 = arith.constant 0 : index
    %c2 = arith.constant 2 : index
    %17 = vector.load %arg2[%c0, %c2] : memref<8x3xf32, #tpu.memory_space<vmem>>, vector<8x1xf32>
    %c1_i32_3 = arith.constant 1 : i32
    %18 = vector.broadcast %c1_i32_3 : i32 to vector<1x24xi32>
    %19 = arith.cmpi eq, %16, %18 : vector<1x24xi32>
    %c0_4 = arith.constant 0 : index
    %c1 = arith.constant 1 : index
    %20 = vector.load %arg2[%c0_4, %c1] : memref<8x3xf32, #tpu.memory_space<vmem>>, vector<8x1xf32>
    %21 = vector.shape_cast %19 : vector<1x24xi1> to vector<1x24xi1>
    %22 = vector.broadcast %21 : vector<1x24xi1> to vector<8x24xi1>
    %23 = vector.shape_cast %20 : vector<8x1xf32> to vector<8x1xf32>
    %24 = vector.broadcast %23 : vector<8x1xf32> to vector<8x24xf32>
    %25 = vector.shape_cast %17 : vector<8x1xf32> to vector<8x1xf32>
    %26 = vector.broadcast %25 : vector<8x1xf32> to vector<8x24xf32>
    %27 = arith.select %22, %24, %26 : vector<8x24xi1>, vector<8x24xf32>
    %c0_i32_5 = arith.constant 0 : i32
    %28 = vector.broadcast %c0_i32_5 : i32 to vector<1x24xi32>
    %29 = arith.cmpi eq, %16, %28 : vector<1x24xi32>
    %c0_6 = arith.constant 0 : index
    %c0_7 = arith.constant 0 : index
    %30 = vector.load %arg2[%c0_6, %c0_7] : memref<8x3xf32, #tpu.memory_space<vmem>>, vector<8x1xf32>
    %31 = vector.shape_cast %29 : vector<1x24xi1> to vector<1x24xi1>
    %32 = vector.broadcast %31 : vector<1x24xi1> to vector<8x24xi1>
    %33 = vector.shape_cast %30 : vector<8x1xf32> to vector<8x1xf32>
    %34 = vector.broadcast %33 : vector<8x1xf32> to vector<8x24xf32>
    %35 = arith.select %32, %34, %27 : vector<8x24xi1>, vector<8x24xf32>
    %c0_8 = arith.constant 0 : index
    %c0_9 = arith.constant 0 : index
    %36 = vector.load %arg1[%c0_8, %c0_9] : memref<8x24xf32, #tpu.memory_space<vmem>>, vector<8x24xf32>
    %37 = arith.subf %36, %35 : vector<8x24xf32>
    %c0_10 = arith.constant 0 : index
    %c0_11 = arith.constant 0 : index
    %38 = vector.load %arg3[%c0_10, %c0_11] : memref<8x24xf32, #tpu.memory_space<vmem>>, vector<8x24xf32>
    tpu.vector_store %arg3[%c0_10, %c0_11], %37 {strides = array<i32>} : memref<8x24xf32, #tpu.memory_space<vmem>>, vector<8x24xf32>,
    return
  }
  func.func @transform_0(%arg0: i32) -> (i32, i32) {
    %c0_i32 = arith.constant 0 : i32
    %c0_i32_0 = arith.constant 0 : i32
    return %arg0, %c0_i32 : i32, i32
  }
  func.func @transform_1(%arg0: i32) -> (i32, i32) {
    %c0_i32 = arith.constant 0 : i32
    %c0_i32_0 = arith.constant 0 : i32
    return %arg0, %c0_i32 : i32, i32
  }
  func.func @transform_2(%arg0: i32) -> (i32, i32) {
    %c0_i32 = arith.constant 0 : i32
    %c0_i32_0 = arith.constant 0 : i32
    return %arg0, %c0_i32 : i32, i32
  }
}

</mosaic_0001>

<llo_original>
// kernel: tpu_custom_call.1
$region0: #{tpu_custom_call.1}
  #allocation0 [shape = 'u32[]', space=smem, size = 0x4, offset = 0x4, fixed_abs, tag = 'smem constant byte address 0x4 - core index']
  #allocation1 [shape = 'u32[144,128]{1,0:T(1,128)}', space=vmem, size = 0x12000, scoped, tag = 'internal scratch']
  %s0 = inlined_call_operand.vmem [shape: f32[8,24], index: 0, kind: input, shape index: {}]
  %s1 = inlined_call_operand.vmem [shape: f32[8,3], index: 1, kind: input, shape index: {}]
  %s2 = inlined_call_operand.hbm [shape: f32[8,24], index: 2, kind: output, shape index: {}]
  %s3 = sld [smem:[#allocation0]]
  $region18: #{tpu_custom_call.1} parent=0
    _
  %s5 = ssub.s32 1, %s3
  %s6 = scalar_select 0, %s5, %s3
  $region1: #{tpu_custom_call.1} parent=0
    #allocation2 [shape = 'u8[4096]{0}', space=vmem, size = 0x1000, scoped, tag = 'output window, operand 0, single buffered']
    #allocation3 [shape = 's32[1]{0}', space=sflag, size = 0x4, scoped, tag = 'scoped memory for tpu_custom_call.1']
    %7 = vsyncpa [#allocation3], 0
    // Predicated region
    $region2: #{tpu_custom_call.1} parent=1 // pred_check
      _
    $region3: #{tpu_custom_call.1} parent=1 // pred_check_branch
      %9 = sbr.rel (0) target = $region5
    $region4: #{tpu_custom_call.1} parent=1 // pred_region
      _
    $region5: #{tpu_custom_call.1} parent=1 // pred_fallthru
      _
    // Predicated region
    $region6: #{tpu_custom_call.1} parent=1 // pred_check
      _
    $region7: #{tpu_custom_call.1} parent=1 // pred_check_branch
      %11 = sbr.rel (0) target = $region9
    $region8: #{tpu_custom_call.1} parent=1 // pred_region
      _
    $region9: #{tpu_custom_call.1} parent=1 // pred_fallthru
      _
    %v12 = vlaneseq
    %v13 = vand.u32 %v12, 127
    %vm14 = vcmp.lt.s32.totalorder %v13, 0
    %v15 = vsub.s32 0, %v13
    %v16 = vsel %vm14, %v15, %v13
    %v17 = vmul.u32.u64.compose %v16, 2863311531
    %v18 = vextract.low.u32 %v17
    %v19 = vextract.high.u32 %v17
    %v20 = vshrl.u32 %v19, 1
    %v21 = vmul.u32 %v20, 3
    %v22 = vsub.s32 %v16, %v21
    %v23 = vsub.s32 0, %v22
    %v24 = vsel %vm14, %v23, %v22
    %vm25 = vcmp.ne.s32.totalorder %v24, 0
    %vm26 = vcmp.lt.s32.totalorder %v24, 0
    %vm27 = vmand %vm26, %vm25
    %v28 = vadd.s32 %v24, 3
    %v29 = vsel %vm27, %v28, %v24
    %v30 = vld [vmem:[%s1] sm:$0xff]
    %vm31 = vcmp.eq.s32.totalorder %v29, 1
    %v32 = vsel %vm31, 1, 0
    %vm33 = vcmp.eq.s32.totalorder %v32, 1
    %35 = vset.pattern.permute.xlu0 1
    %36 = vperm.xlu0 %35, %v30
    %v37 = vpop.permute.xlu0 %36
    %39 = vset.pattern.permute.xlu0 2
    %40 = vperm.xlu0 %39, %v30
    %v41 = vpop.permute.xlu0 %40
    %v43 = vsel %vm33, %v37, %v41
    %vm44 = vcmp.eq.s32.totalorder %v29, 0
    %v45 = vsel %vm44, 1, 0
    %vm46 = vcmp.eq.s32.totalorder %v45, 1
    %47 = vset.pattern.permute.xlu0 0
    %48 = vperm.xlu0 %47, %v30
    %v49 = vpop.permute.xlu0 %48
    %v51 = vsel %vm46, %v49, %v43
    %v52 = vld [vmem:[%s0] sm:$0xff]
    %v53 = vsub.f32 %v52, %v51
    %vm54 = vcmask 195584
    %55 = vst.msk [vmem:[#allocation2] sm:$0xff] %vm54, %v53
    // Predicated region
    $region10: #{tpu_custom_call.1} parent=1 // pred_check
      _
    $region11: #{tpu_custom_call.1} parent=1 // pred_check_branch
      %57 = sbr.rel (0) target = $region13
    $region12: #{tpu_custom_call.1} parent=1 // pred_region
      %s59 = ssub.s32 128, 128
      %60 = vsyncadd [#allocation3], %s59
      %s62 = sshll.u32 [#allocation2], 4
      %s63 = int_to_ptr.vmem [resolvable:$true] %s62
      %65 = dma.vmem_to_hbm [thread:$0]  %s63, 128, %s2, [#allocation3]
    $region13: #{tpu_custom_call.1} parent=1 // pred_fallthru
      _
    // Predicated region
    $region14: #{tpu_custom_call.1} parent=1 // pred_check
      _
    $region15: #{tpu_custom_call.1} parent=1 // pred_check_branch
      %67 = sbr.rel (0) target = $region17
    $region16: #{tpu_custom_call.1} parent=1 // pred_region
      %68 = dma.done [#allocation3], 128
    $region17: #{tpu_custom_call.1} parent=1 // pred_fallthru
      _
    %69 = vsyncpa [#allocation3], 1

</llo_original>
